<compile_context>
chip_gen: v7x
topology: tpu7x:2x2x1
jax: 0.10.0
libtpu: 0.0.40
codegen_flags: <defaults>
</compile_context>

<pallas_src>
import functools

import jax
import jax.numpy as jnp
from jax import lax
from jax.experimental import pallas as pl
from jax.experimental.pallas import tpu as pltpu

LANES = 128
CHUNK_ROWS = 256           # in-kernel accumulation chunk: 256*128*4B = 128 KiB f32
MAX_BLOCK_ROWS = 8192      # 8192*128*4B = 4 MiB per f32 input tile
MIN_SPLIT_ROWS = 1024      # only force >=2 grid steps above 2*this many rows
VMEM_LIMIT_BYTES = 32 * 1024 * 1024


def _modulator(one_minus_pt, gamma):
    """(1 - pt) ** gamma; integer gamma uses multiplies (no pow / log(0) hazard)."""
    g_int = int(gamma)
    if float(gamma) == float(g_int) and 0 <= g_int <= 8:
        if g_int == 0:
            return jnp.ones_like(one_minus_pt)
        m = one_minus_pt
        for _ in range(g_int - 1):
            m = m * one_minus_pt
        return m
    return one_minus_pt ** jnp.float32(gamma)


def _focal_unit(p, t, gamma):
    """Per-element (1 - pt)**gamma * bce in f32 (alpha applied on the final scalar)."""
    p = p.astype(jnp.float32)
    t = t.astype(jnp.float32)
    # PyTorch's binary_cross_entropy clamps each log term at -100.
    log_p = jnp.maximum(jnp.log(p), -100.0)
    log_1mp = jnp.maximum(jnp.log(1.0 - p), -100.0)
    # s = -bce = t*log(p) + (1-t)*log(1-p), refactored to save VALU ops.
    s = log_1mp + t * (log_p - log_1mp)
    pt = jnp.exp(s)
    return _modulator(1.0 - pt, gamma) * (-s)


def _focal_loss_block_kernel(x_ref, t_ref, o_ref, *, gamma, block_rows, chunk_rows):
    num_chunks = block_rows // chunk_rows

    def chunk_sum(c, acc):
        r0 = pl.multiple_of(c * chunk_rows, chunk_rows)
        fl = _focal_unit(
            x_ref[pl.ds(r0, chunk_rows), :],
            t_ref[pl.ds(r0, chunk_rows), :],
            gamma,
        )
        # (chunk_rows, 128) -> (8, 128): reshape follows the native (8, 128)
        # tiling (chunk_rows is a multiple of 8), so this is pure vreg adds.
        return acc + jnp.sum(fl.reshape(chunk_rows // 8, 8, LANES), axis=0)

    acc = lax.fori_loop(
        0, num_chunks, chunk_sum, jnp.zeros((8, LANES), jnp.float32), unroll=True
    )
    o_ref[...] = acc.reshape(1, 8, LANES)


def _pick_block_rows(aligned_rows):
    """Block rows: multiple of CHUNK_ROWS (or 8), <= MAX_BLOCK_ROWS, >=2 steps if big."""
    num_blocks = -(-aligned_rows // MAX_BLOCK_ROWS)            # cdiv
    if num_blocks == 1 and aligned_rows >= 2 * MIN_SPLIT_ROWS:
        num_blocks = 2                                         # v7x: feed both TCs
    br = aligned_rows // num_blocks
    quant = CHUNK_ROWS if br >= CHUNK_ROWS else 8
    return max((br // quant) * quant, 8)


@functools.partial(jax.jit, static_argnames=("alpha", "gamma"))
def focal_loss(inputs, targets, alpha=1.0, gamma=2.0):
    """Pallas TPU focal loss (logits=False, reduce=True). Returns scalar f32."""
    assert inputs.shape == targets.shape
    n = inputs.size
    x = inputs.reshape(-1)
    t = targets.reshape(-1)

    rows = n // LANES                         # full 128-lane rows
    lane_tail = n - rows * LANES              # < 128 leftover elements
    aligned_rows = (rows // 8) * 8            # kernel rows must be a multiple of 8

    total = jnp.zeros((), jnp.float32)
    main_rows = 0

    if aligned_rows >= 8:
        block_rows = _pick_block_rows(aligned_rows)
        num_blocks = aligned_rows // block_rows
        main_rows = num_blocks * block_rows
        n_main = main_rows * LANES

        if lane_tail == 0:
            # Free reshape, no copy: the grid simply never visits rows past
            # main_rows, so no concatenate / padding pass over HBM.
            x2d = x.reshape(rows, LANES)
            t2d = t.reshape(rows, LANES)
        else:
            # Rare path (element count not a multiple of 128): slice only the
            # 128-aligned prefix the kernel actually reads.
            x2d = x[:n_main].reshape(main_rows, LANES)
            t2d = t[:n_main].reshape(main_rows, LANES)

        chunk_rows = min(CHUNK_ROWS, block_rows)
        kernel = functools.partial(
            _focal_loss_block_kernel,
            gamma=float(gamma),
            block_rows=block_rows,
            chunk_rows=chunk_rows,
        )

        bytes_accessed = (
            n_main * (x2d.dtype.itemsize + t2d.dtype.itemsize)
            + num_blocks * 8 * LANES * 4
        )
        partials = pl.pallas_call(
            kernel,
            out_shape=jax.ShapeDtypeStruct((num_blocks, 8, LANES), jnp.float32),
            grid_spec=pltpu.PrefetchScalarGridSpec(
                num_scalar_prefetch=0,
                grid=(num_blocks,),
                in_specs=[
                    pl.BlockSpec((block_rows, LANES), lambda i: (i, 0)),
                    pl.BlockSpec((block_rows, LANES), lambda i: (i, 0)),
                ],
                out_specs=pl.BlockSpec((1, 8, LANES), lambda i: (i, 0, 0)),
            ),
            compiler_params=pltpu.CompilerParams(
                dimension_semantics=("parallel",),     # megacore-friendly on v7x
                vmem_limit_bytes=VMEM_LIMIT_BYTES,
            ),
            cost_estimate=pl.CostEstimate(
                flops=12 * n_main,
                transcendentals=3 * n_main,
                bytes_accessed=bytes_accessed,
            ),
        )(x2d, t2d)
        total = total + jnp.sum(partials)

    # Leftover rows (< one block) plus the sub-128 tail: tiny, fused by XLA
    # directly from the original buffer (no full-array copies).
    rem_start = main_rows * LANES
    if rem_start < n:
        total = total + jnp.sum(_focal_unit(x[rem_start:], t[rem_start:], float(gamma)))

    return jnp.float32(alpha) * total / jnp.float32(n)


def focal_loss_ref(inputs, targets, alpha=1.0, gamma=2.0):
    p = inputs.astype(jnp.float32)
    t = targets.astype(jnp.float32)
    log_p = jnp.maximum(jnp.log(p), -100.0)
    log_1mp = jnp.maximum(jnp.log(1.0 - p), -100.0)
    bce = -(t * log_p + (1.0 - t) * log_1mp)
    pt = jnp.exp(-bce)
    return jnp.mean(alpha * (1.0 - pt) ** gamma * bce)


if __name__ == "__main__":
    key = jax.random.PRNGKey(0)
    keys = jax.random.split(key, 6)

    # 1) NCHW probabilities, 128-aligned element count: pure kernel path.
    shape1 = (2, 4, 16, 16)
    x1 = jax.nn.sigmoid(jax.random.normal(keys[0], shape1, dtype=jnp.float32))
    t1 = jax.random.bernoulli(keys[1], p=0.5, shape=shape1).astype(jnp.float32)
    out1 = jax.block_until_ready(focal_loss(x1, t1, alpha=1.0, gamma=2.0))
    ref1 = focal_loss_ref(x1, t1, alpha=1.0, gamma=2.0)
    assert jnp.allclose(out1, ref1, rtol=3e-5, atol=1e-6), (out1, ref1)

    # 2) 128-aligned but not block-aligned: exercises the in-kernel chunk loop
    #    and the small fused-JAX row remainder (no padding copies anywhere).
    shape2 = (5, 104, 128)
    x2 = jax.nn.sigmoid(jax.random.normal(keys[2], shape2, dtype=jnp.float32))
    t2 = jax.random.bernoulli(keys[3], p=0.5, shape=shape2).astype(jnp.float32)
    out2 = jax.block_until_ready(focal_loss(x2, t2, alpha=0.25, gamma=2.0))
    ref2 = focal_loss_ref(x2, t2, alpha=0.25, gamma=2.0)
    assert jnp.allclose(out2, ref2, rtol=3e-5, atol=1e-6), (out2, ref2)

    # 3) Fully unaligned tiny shape: handled by the fused plain-JAX tail.
    shape3 = (2, 3, 7, 5)
    x3 = jax.nn.sigmoid(jax.random.normal(keys[4], shape3, dtype=jnp.float32))
    t3 = jax.random.bernoulli(keys[5], p=0.5, shape=shape3).astype(jnp.float32)
    out3 = jax.block_until_ready(focal_loss(x3, t3, alpha=1.0, gamma=2.0))
    ref3 = focal_loss_ref(x3, t3, alpha=1.0, gamma=2.0)
    assert jnp.allclose(out3, ref3, rtol=3e-5, atol=1e-6), (out3, ref3)

    print("KERNEL_OK")
</pallas_src>

<mosaic_0001>
module attributes {stable_mosaic.version = 11 : i64} {
  func.func @_focal_loss_block_kernel(%arg0: i32, %arg1: memref<16x128xf32, #tpu.memory_space<vmem>>, %arg2: memref<16x128xf32, #tpu.memory_space<vmem>>, %arg3: memref<1x8x128xf32, #tpu.memory_space<vmem>>) attributes {dimension_semantics = [#tpu.dimension_semantics<parallel>], iteration_bounds = array<i64: 1>, scalar_prefetch = 0 : i64, scratch_operands = 0 : i64, tpu.core_type = #tpu.core_type<tc>, window_params = [{transform_indices = @transform_0, window_bounds = array<i64: 16, 128>}, {transform_indices = @transform_1, window_bounds = array<i64: 16, 128>}, {transform_indices = @transform_2, window_bounds = array<i64: 1, 8, 128>}]} {
    %cst = arith.constant 0.000000e+00 : f32
    %0 = vector.broadcast %cst : f32 to vector<8x128xf32>
    %c0_i32 = arith.constant 0 : i32
    %c16_i32 = arith.constant 16 : i32
    %1 = arith.muli %c0_i32, %c16_i32 : i32
    %2 = tpu.assume_multiple %1, 16 : i32
    %3 = arith.index_cast %2 : i32 to index
    %c0 = arith.constant 0 : index
    %4 = vector.load %arg1[%3, %c0] : memref<16x128xf32, #tpu.memory_space<vmem>>, vector<16x128xf32>
    %5 = arith.index_cast %2 : i32 to index
    %c0_0 = arith.constant 0 : index
    %6 = vector.load %arg2[%5, %c0_0] : memref<16x128xf32, #tpu.memory_space<vmem>>, vector<16x128xf32>
    %7 = math.log %4 : vector<16x128xf32>
    %cst_1 = arith.constant -1.000000e+02 : f32
    %8 = vector.broadcast %cst_1 : f32 to vector<16x128xf32>
    %9 = arith.maximumf %7, %8 : vector<16x128xf32>
    %cst_2 = arith.constant 1.000000e+00 : f32
    %10 = vector.broadcast %cst_2 : f32 to vector<16x128xf32>
    %11 = arith.subf %10, %4 : vector<16x128xf32>
    %12 = math.log %11 : vector<16x128xf32>
    %cst_3 = arith.constant -1.000000e+02 : f32
    %13 = vector.broadcast %cst_3 : f32 to vector<16x128xf32>
    %14 = arith.maximumf %12, %13 : vector<16x128xf32>
    %15 = arith.subf %9, %14 : vector<16x128xf32>
    %16 = arith.mulf %6, %15 : vector<16x128xf32>
    %17 = arith.addf %14, %16 : vector<16x128xf32>
    %18 = math.exp %17 : vector<16x128xf32>
    %cst_4 = arith.constant 1.000000e+00 : f32
    %19 = vector.broadcast %cst_4 : f32 to vector<16x128xf32>
    %20 = arith.subf %19, %18 : vector<16x128xf32>
    %21 = arith.mulf %20, %20 : vector<16x128xf32>
    %cst_5 = arith.constant 0.000000e+00 : f32
    %22 = vector.broadcast %cst_5 : f32 to vector<16x128xf32>
    %23 = arith.subf %22, %17 : vector<16x128xf32>
    %24 = arith.mulf %21, %23 : vector<16x128xf32>
    %25 = vector.shape_cast %24 : vector<16x128xf32> to vector<2x8x128xf32>
    %cst_6 = arith.constant dense<0.000000e+00> : vector<8x128xf32>
    %26 = vector.multi_reduction <add>, %25, %cst_6 [0] : vector<2x8x128xf32> to vector<8x128xf32>
    %27 = arith.addf %0, %26 : vector<8x128xf32>
    %c1_i32 = arith.constant 1 : i32
    %28 = vector.shape_cast %27 : vector<8x128xf32> to vector<1x8x128xf32>
    %c0_7 = arith.constant 0 : index
    %c0_8 = arith.constant 0 : index
    %c0_9 = arith.constant 0 : index
    %29 = vector.load %arg3[%c0_7, %c0_8, %c0_9] : memref<1x8x128xf32, #tpu.memory_space<vmem>>, vector<1x8x128xf32>
    tpu.vector_store %arg3[%c0_7, %c0_8, %c0_9], %28 {strides = array<i32>} : memref<1x8x128xf32, #tpu.memory_space<vmem>>, vector<1x8x128xf32>,
    return
  }
  func.func @transform_0(%arg0: i32) -> (i32, i32) {
    %c0_i32 = arith.constant 0 : i32
    %c0_i32_0 = arith.constant 0 : i32
    return %arg0, %c0_i32 : i32, i32
  }
  func.func @transform_1(%arg0: i32) -> (i32, i32) {
    %c0_i32 = arith.constant 0 : i32
    %c0_i32_0 = arith.constant 0 : i32
    return %arg0, %c0_i32 : i32, i32
  }
  func.func @transform_2(%arg0: i32) -> (i32, i32, i32) {
    %c0_i32 = arith.constant 0 : i32
    %c0_i32_0 = arith.constant 0 : i32
    %c0_i32_1 = arith.constant 0 : i32
    return %arg0, %c0_i32, %c0_i32_0 : i32, i32, i32
  }
}

</mosaic_0001>

<llo_original>
// kernel: focal_loss.1
$region0: #{focal_loss.1}
  #allocation0 [shape = 'u32[]', space=smem, size = 0x4, offset = 0x4, fixed_abs, tag = 'smem constant byte address 0x4 - core index']
  #allocation1 [shape = 'u32[144,128]{1,0:T(1,128)}', space=vmem, size = 0x12000, scoped, tag = 'internal scratch']
  %s0 = inlined_call_operand.vmem [shape: f32[16,128], index: 0, kind: input, shape index: {}]
  %s1 = inlined_call_operand.vmem [shape: f32[16,128], index: 1, kind: input, shape index: {}]
  %s2 = inlined_call_operand.vmem [shape: f32[1,8,128], index: 2, kind: output, shape index: {}]
  %s3 = sld [smem:[#allocation0]]
  $region18: #{focal_loss.1} parent=0
    _
  %s5 = ssub.s32 1, %s3
  %s6 = scalar_select 0, %s5, %s3
  // Predicated region
  $region2: #{focal_loss.1} parent=0 // pred_check
    _
  $region3: #{focal_loss.1} parent=0 // pred_check_branch
    %8 = sbr.rel (0) target = $region5
  $region4: #{focal_loss.1} parent=0 // pred_region
    _
  $region5: #{focal_loss.1} parent=0 // pred_fallthru
    _
  // Predicated region
  $region6: #{focal_loss.1} parent=0 // pred_check
    _
  $region7: #{focal_loss.1} parent=0 // pred_check_branch
    %10 = sbr.rel (0) target = $region9
  $region8: #{focal_loss.1} parent=0 // pred_region
    _
  $region9: #{focal_loss.1} parent=0 // pred_fallthru
    _
  %v11 = vld [vmem:[%s0] sm:$0xff]
  %v12 = vld [vmem:[%s0 + $0x8] sm:$0xff]
  %v13 = vld [vmem:[%s1] sm:$0xff]
  %v14 = vld [vmem:[%s1 + $0x8] sm:$0xff]
  %v15 = vlog2.pop %v11
  %v16 = vmul.f32 %v15, 0.6931472
  %v17 = vlog2.pop %v12
  %v18 = vmul.f32 %v17, 0.6931472
  %v19 = vmax.f32 %v16, -100.0
  %v20 = vmax.f32 %v18, -100.0
  %v21 = vsub.f32 1.0, %v11
  %v22 = vsub.f32 1.0, %v12
  %v23 = vlog2.pop %v21
  %v24 = vmul.f32 %v23, 0.6931472
  %v25 = vlog2.pop %v22
  %v26 = vmul.f32 %v25, 0.6931472
  %v27 = vmax.f32 %v24, -100.0
  %v28 = vmax.f32 %v26, -100.0
  %v29 = vsub.f32 %v19, %v27
  %v30 = vsub.f32 %v20, %v28
  %v31 = vmul.f32 %v13, %v29
  %v32 = vmul.f32 %v14, %v30
  %v33 = vadd.f32 %v27, %v31
  %v34 = vadd.f32 %v28, %v32
  %v35 = vmul.f32 %v33, 1.442695
  %v36 = vpow.pop %v35
  %v37 = vmul.f32 %v34, 1.442695
  %v38 = vpow.pop %v37
  %v39 = vsub.f32 1.0, %v36
  %v40 = vsub.f32 1.0, %v38
  %v41 = vmul.f32 %v39, %v39
  %v42 = vmul.f32 %v40, %v40
  %v43 = vsub.f32 0.0, %v33
  %v44 = vsub.f32 0.0, %v34
  %v45 = vmul.f32 %v41, %v43
  %v46 = vmul.f32 %v42, %v44
  %v47 = vadd.f32 %v45, %v46
  %v48 = vadd.f32 %v47, 0.0
  %49 = vst [vmem:[%s2] sm:$0xff] %v48
  // Predicated region
  $region10: #{focal_loss.1} parent=0 // pred_check
    _
  $region11: #{focal_loss.1} parent=0 // pred_check_branch
    %51 = sbr.rel (0) target = $region13
  $region12: #{focal_loss.1} parent=0 // pred_region
    _
  $region13: #{focal_loss.1} parent=0 // pred_fallthru
    _
  // Predicated region
  $region14: #{focal_loss.1} parent=0 // pred_check
    _
  $region15: #{focal_loss.1} parent=0 // pred_check_branch
    %53 = sbr.rel (0) target = $region17
  $region16: #{focal_loss.1} parent=0 // pred_region
    _
  $region17: #{focal_loss.1} parent=0 // pred_fallthru
    _

</llo_original>
